<compile_context>
chip_gen: v7x
topology: tpu7x:2x2x1
jax: 0.10.0
libtpu: 0.0.40
codegen_flags: <defaults>
</compile_context>

<pallas_src>
import functools
import math

import jax
import jax.numpy as jnp
from jax.experimental import pallas as pl
from jax.experimental.pallas import tpu as pltpu


def _arcface_subcenter_kernel(xn_ref, w_ref, o_ref, *, k: int):
    """One grid step: max-over-k cosines for one (batch tile, class tile).

    xn_ref : (TB, D)      pre-normalised features for this batch tile
    w_ref  : (k, D, TN)   pre-normalised sub-center weight slabs for this class tile
    o_ref  : (TB, TN)     output cosine tile
    """
    xn = xn_ref[...].astype(jnp.float32)
    cos = None
    for j in range(k):  # k is tiny (e.g. 3) -> static unroll
        w = w_ref[j].astype(jnp.float32)  # (D, TN); no-op cast for f32 weights
        c = jnp.dot(xn, w, preferred_element_type=jnp.float32)  # MXU, contracts D
        cos = c if cos is None else jnp.maximum(cos, c)
    o_ref[...] = cos.astype(o_ref.dtype)


def prepare_arcface_weight(weight, out_features: int, k: int,
                           stream_dtype=jnp.float32):
    """PyTorch layout (out_features*k, D) -> pre-normalised (k, D, out_features).

    Call once at parameter-init / weight-update time and reuse across forward calls
    (this is the HBM re-layout the forward must not pay per call).  Use
    `stream_dtype=jnp.bfloat16` to halve weight HBM traffic at inference.
    """
    n_rows, D = weight.shape
    assert n_rows == out_features * k, (weight.shape, out_features, k)
    # F.normalize(weight, dim=1)
    wn = weight / jnp.maximum(
        jnp.linalg.norm(weight, axis=-1, keepdims=True), 1e-12)
    # row c*k + j  ->  w[j, :, c]   (matches cosine_all.view(-1, out_features, k))
    w = wn.reshape(out_features, k, D).transpose(1, 2, 0)
    return w.astype(stream_dtype)


def _auto_tile_n(out_features: int, D: int, b_blk: int, k: int, w_itemsize: int,
                 budget_bytes: int = 40 << 20):
    """Largest lane-dense class tile whose VMEM footprint fits a v7x-safe budget."""
    def vmem_bytes(t):
        return (2 * k * D * t * w_itemsize   # double-buffered weight tile
                + 2 * b_blk * D * 4          # feature block
                + 2 * b_blk * t * 4)         # double-buffered output tile

    cap = min(out_features, 4096)
    cands = [t for t in range(cap - cap % 128, 0, -128) if out_features % t == 0]
    if not cands:
        cands = [out_features]  # lane dim == full array dim is always legal
    fitting = [t for t in cands if vmem_bytes(t) <= budget_bytes]
    if not fitting:
        return cands[-1]
    # Prefer >= 2 class tiles so both TensorCores (v7x) get work on the class axis.
    for t in fitting:
        if out_features // t >= 2:
            return t
    return fitting[0]


def _auto_tile_b(B: int):
    """Batch tile for large batches; None => keep the whole batch resident."""
    if B < 256:
        return None
    for t in (512, 256, 128):
        if B % t == 0 and B // t >= 2:
            return t
    return None


def arcface_subcenter_forward(features, w_prepared, tile_n=None, tile_b=None):
    """features   : (B, D)
       w_prepared : (k, D, out_features) from prepare_arcface_weight()
       returns    : (B, out_features) max-over-k cosine similarities
    """
    B, D = features.shape
    k, D2, N = w_prepared.shape
    assert D2 == D, (w_prepared.shape, features.shape)

    if tile_b is None:
        tile_b = _auto_tile_b(B)
    b_blk = tile_b if tile_b is not None else B

    w_itemsize = jnp.dtype(w_prepared.dtype).itemsize
    if tile_n is None:
        tile_n = _auto_tile_n(N, D, b_blk, k, w_itemsize)
    assert N % tile_n == 0, "class tile must divide out_features"

    # F.normalize(features, dim=1): computed ONCE here (tiny (B, D) op, fused under
    # jit), not once per class tile inside the kernel.
    x = features.astype(jnp.float32)
    xn = x / jnp.maximum(jnp.sqrt(jnp.sum(x * x, axis=-1, keepdims=True)), 1e-12)

    vmem_need = (2 * k * D * tile_n * w_itemsize
                 + 2 * b_blk * D * 4
                 + 2 * b_blk * tile_n * 4)
    vmem_limit = max(32 << 20, int(vmem_need * 1.5))

    kernel = functools.partial(_arcface_subcenter_kernel, k=k)

    if tile_b is None:
        # Single resident feature block; grid only over class tiles.
        grid = (N // tile_n,)
        in_specs = [
            pl.BlockSpec((B, D), lambda i: (0, 0)),          # DMA'd once (same block)
            pl.BlockSpec((k, D, tile_n), lambda i: (0, 0, i)),
        ]
        out_specs = pl.BlockSpec((B, tile_n), lambda i: (0, i))
        dim_sem = ("parallel",)
    else:
        # Classes outer (axis 0), batch inner (axis 1): weight tile is fetched once
        # per class tile; only the small feature tile is re-streamed per batch tile.
        grid = (N // tile_n, B // tile_b)
        in_specs = [
            pl.BlockSpec((tile_b, D), lambda i, j: (j, 0)),
            pl.BlockSpec((k, D, tile_n), lambda i, j: (0, 0, i)),
        ]
        out_specs = pl.BlockSpec((tile_b, tile_n), lambda i, j: (j, i))
        dim_sem = ("parallel", "parallel")

    return pl.pallas_call(
        kernel,
        out_shape=jax.ShapeDtypeStruct((B, N), features.dtype),
        grid_spec=pltpu.PrefetchScalarGridSpec(
            num_scalar_prefetch=0,
            grid=grid,
            in_specs=in_specs,
            out_specs=out_specs,
        ),
        compiler_params=pltpu.CompilerParams(
            dimension_semantics=dim_sem,
            vmem_limit_bytes=vmem_limit,
        ),
    )(xn, w_prepared)


def _reference(features, weight, out_features, k):
    xn = features / jnp.maximum(
        jnp.linalg.norm(features, axis=-1, keepdims=True), 1e-12)
    wn = weight / jnp.maximum(
        jnp.linalg.norm(weight, axis=-1, keepdims=True), 1e-12)
    cosine_all = (xn @ wn.T).reshape(-1, out_features, k)
    return jnp.max(cosine_all, axis=2)


def _make_problem(key, B, in_features, out_features, k):
    kx, kw = jax.random.split(key)
    # Deterministic init mirroring reset_parameters(): uniform(-stdv, stdv).
    stdv = 1.0 / math.sqrt(in_features)
    weight = jax.random.uniform(
        kw, (out_features * k, in_features), dtype=jnp.float32,
        minval=-stdv, maxval=stdv)
    features = jax.random.normal(kx, (B, in_features), dtype=jnp.float32)
    return features, weight


if __name__ == "__main__":
    key = jax.random.PRNGKey(0)
    fwd = jax.jit(arcface_subcenter_forward, static_argnums=(2, 3))

    # --- Case 1: small problem consistent with the module's forward --------------
    B, in_features, out_features, k = 8, 64, 256, 3
    features, weight = _make_problem(key, B, in_features, out_features, k)
    ref = _reference(features, weight, out_features, k)

    # f32 weight streaming: bit-comparable to the f32 reference.
    w_f32 = prepare_arcface_weight(weight, out_features, k)   # once per weight update
    out = jax.block_until_ready(fwd(features, w_f32))
    assert out.shape == (B, out_features), out.shape
    assert jnp.allclose(out, ref, atol=1e-5, rtol=1e-5), float(
        jnp.max(jnp.abs(out - ref)))

    # bf16 weight streaming: halves weight HBM traffic (the actual bottleneck),
    # f32 MXU accumulation; accuracy at bf16 level.
    w_bf16 = prepare_arcface_weight(weight, out_features, k,
                                    stream_dtype=jnp.bfloat16)
    out_bf16 = jax.block_until_ready(fwd(features, w_bf16))
    assert jnp.allclose(out_bf16, ref, atol=2e-2, rtol=0.0), float(
        jnp.max(jnp.abs(out_bf16 - ref)))

    # --- Case 2: larger batch exercising the batch-tiled (2-D grid) path ----------
    B2, in2, out2 = 256, 128, 512
    key2 = jax.random.PRNGKey(0)
    features2, weight2 = _make_problem(key2, B2, in2, out2, k)
    ref2 = _reference(features2, weight2, out2, k)
    w2 = prepare_arcface_weight(weight2, out2, k)
    out2_arr = jax.block_until_ready(fwd(features2, w2))
    assert out2_arr.shape == (B2, out2), out2_arr.shape
    assert jnp.allclose(out2_arr, ref2, atol=1e-5, rtol=1e-5), float(
        jnp.max(jnp.abs(out2_arr - ref2)))

    print("KERNEL_OK")
</pallas_src>

<mosaic_0001>
module attributes {stable_mosaic.version = 11 : i64} {
  func.func @_arcface_subcenter_kernel(%arg0: i32, %arg1: memref<8x64xf32, #tpu.memory_space<vmem>>, %arg2: memref<3x64x128xf32, #tpu.memory_space<vmem>>, %arg3: memref<8x128xf32, #tpu.memory_space<vmem>>) attributes {dimension_semantics = [#tpu.dimension_semantics<parallel>], iteration_bounds = array<i64: 2>, scalar_prefetch = 0 : i64, scratch_operands = 0 : i64, tpu.core_type = #tpu.core_type<tc>, window_params = [{pipeline_mode = #tpu.pipeline_mode<synchronous>, transform_indices = @transform_0, window_bounds = array<i64: 8, 64>}, {transform_indices = @transform_1, window_bounds = array<i64: 3, 64, 128>}, {transform_indices = @transform_2, window_bounds = array<i64: 8, 128>}]} {
    %c0 = arith.constant 0 : index
    %c0_0 = arith.constant 0 : index
    %0 = vector.load %arg1[%c0, %c0_0] : memref<8x64xf32, #tpu.memory_space<vmem>>, vector<8x64xf32>
    %c0_1 = arith.constant 0 : index
    %c0_2 = arith.constant 0 : index
    %c0_3 = arith.constant 0 : index
    %1 = vector.load %arg2[%c0_1, %c0_2, %c0_3] : memref<3x64x128xf32, #tpu.memory_space<vmem>>, vector<1x64x128xf32>
    %2 = vector.shape_cast %1 : vector<1x64x128xf32> to vector<64x128xf32>
    %cst = arith.constant dense<0.000000e+00> : vector<8x128xf32>
    %3 = tpu.matmul %0, %2, %cst {dimension_numbers = #tpu.dot_dimension_numbers<[1], [0], [0], [1], [0, 0, 1, 1], [], []>} : vector<8x64xf32>, vector<64x128xf32>, vector<8x128xf32> -> vector<8x128xf32>
    %c1 = arith.constant 1 : index
    %c0_4 = arith.constant 0 : index
    %c0_5 = arith.constant 0 : index
    %4 = vector.load %arg2[%c1, %c0_4, %c0_5] : memref<3x64x128xf32, #tpu.memory_space<vmem>>, vector<1x64x128xf32>
    %5 = vector.shape_cast %4 : vector<1x64x128xf32> to vector<64x128xf32>
    %cst_6 = arith.constant dense<0.000000e+00> : vector<8x128xf32>
    %6 = tpu.matmul %0, %5, %cst_6 {dimension_numbers = #tpu.dot_dimension_numbers<[1], [0], [0], [1], [0, 0, 1, 1], [], []>} : vector<8x64xf32>, vector<64x128xf32>, vector<8x128xf32> -> vector<8x128xf32>
    %7 = arith.maximumf %3, %6 : vector<8x128xf32>
    %c2 = arith.constant 2 : index
    %c0_7 = arith.constant 0 : index
    %c0_8 = arith.constant 0 : index
    %8 = vector.load %arg2[%c2, %c0_7, %c0_8] : memref<3x64x128xf32, #tpu.memory_space<vmem>>, vector<1x64x128xf32>
    %9 = vector.shape_cast %8 : vector<1x64x128xf32> to vector<64x128xf32>
    %cst_9 = arith.constant dense<0.000000e+00> : vector<8x128xf32>
    %10 = tpu.matmul %0, %9, %cst_9 {dimension_numbers = #tpu.dot_dimension_numbers<[1], [0], [0], [1], [0, 0, 1, 1], [], []>} : vector<8x64xf32>, vector<64x128xf32>, vector<8x128xf32> -> vector<8x128xf32>
    %11 = arith.maximumf %7, %10 : vector<8x128xf32>
    %c0_10 = arith.constant 0 : index
    %c0_11 = arith.constant 0 : index
    %12 = vector.load %arg3[%c0_10, %c0_11] : memref<8x128xf32, #tpu.memory_space<vmem>>, vector<8x128xf32>
    tpu.vector_store %arg3[%c0_10, %c0_11], %11 {strides = array<i32>} : memref<8x128xf32, #tpu.memory_space<vmem>>, vector<8x128xf32>,
    return
  }
  func.func @transform_0(%arg0: i32) -> (i32, i32) {
    %c0_i32 = arith.constant 0 : i32
    %c0_i32_0 = arith.constant 0 : i32
    %c0_i32_1 = arith.constant 0 : i32
    return %c0_i32, %c0_i32_0 : i32, i32
  }
  func.func @transform_1(%arg0: i32) -> (i32, i32, i32) {
    %c0_i32 = arith.constant 0 : i32
    %c0_i32_0 = arith.constant 0 : i32
    %c0_i32_1 = arith.constant 0 : i32
    return %c0_i32, %c0_i32_0, %arg0 : i32, i32, i32
  }
  func.func @transform_2(%arg0: i32) -> (i32, i32) {
    %c0_i32 = arith.constant 0 : i32
    %c0_i32_0 = arith.constant 0 : i32
    return %c0_i32, %arg0 : i32, i32
  }
}

</mosaic_0001>

<llo_original>
// kernel: arcface_subcenter_forward.1
$region0: #{arcface_subcenter_forward.1}
  #allocation0 [shape = 'u32[]', space=smem, size = 0x4, offset = 0x4, fixed_abs, tag = 'smem constant byte address 0x4 - core index']
  #allocation1 [shape = 'u32[144,128]{1,0:T(1,128)}', space=vmem, size = 0x12000, scoped, tag = 'internal scratch']
  %s0 = inlined_call_operand.vmem [shape: f32[8,64], index: 0, kind: input, shape index: {}]
  %s1 = inlined_call_operand.hbm [shape: f32[3,64,256], index: 1, kind: input, shape index: {}]
  %s2 = inlined_call_operand.hbm [shape: f32[8,256], index: 2, kind: output, shape index: {}]
  %s3 = sld [smem:[#allocation0]]
  $region45: #{arcface_subcenter_forward.1} parent=0
    _
  %s5 = ssub.s32 1, %s3
  %s6 = scalar_select 0, %s5, %s3
  $region1: #{arcface_subcenter_forward.1} parent=0
    #allocation2 [shape = 'u8[196608]{0}', space=vmem, size = 0x30000, scoped, tag = 'input window, operand 1']
    #allocation3 [shape = 's32[2]{0}', space=sflag, size = 0x8, scoped, tag = 'scoped memory for arcface_subcenter_forward.1']
    #allocation4 [shape = 's32[2]{0}', space=sflag, size = 0x8, scoped, tag = 'scoped memory for arcface_subcenter_forward.1']
    #allocation5 [shape = 'u8[8192]{0}', space=vmem, size = 0x2000, scoped, tag = 'output window, operand 0']
    %7 = vsyncpa [#allocation3], 0
    %s8 = scalar_lea.sflag [#allocation3], 1
    %9 = vsyncpa %s8, 0
    %10 = vsyncpa [#allocation4], 0
    %s11 = scalar_lea.sflag [#allocation4], 1
    %12 = vsyncpa %s11, 0
    loop: start=0, step=1, limit=4
    $region2: #{arcface_subcenter_forward.1} parent=1 // loop_pre_header
      _
    $region3: #{arcface_subcenter_forward.1} parent=1 // loop_header
      %s14 = sphi 0, %s18
      %p15 = scmp.ge.s32.totalorder %s14, 4
      %s22 = sphi 0, %s22
      %s24 = sphi 0, %s22
      %s25 = sphi 0, %s24
      %s39 = sphi 0, %s25
      %s45 = sphi 0, %s47
      %s48 = sphi 0, %s45
      %s49 = sphi 0, %s48
      %s65 = sphi 0, %s49
      %s71 = sphi 0, %s73
      %s74 = sphi 0, %s71
      %s75 = sphi 0, %s74
      %s91 = sphi 0, %s75
    $region4: #{arcface_subcenter_forward.1} parent=1 // loop_header_branch
      %17 = sbr.rel (%p15) target = $region8
    $region5: #{arcface_subcenter_forward.1} parent=1 // loop_body
      %s19 = ssub.s32 %s14, 1
      %s20 = ssub.s32 %s14, 2
      %s21 = sadd.s32 %s14, 1
      %s23 = sadd.s32 %s22, 1
      %p26 = scmp.eq.s32.totalorder %s14, 1
      %p27 = scmp.ne.s32.totalorder %s22, %s24
      %p28 = scmp.eq.s32.totalorder %s14, 0
      %p29 = por %p27, %p28
      %p30 = scmp.ne.s32.totalorder %s22, %s24
      %p31 = scmp.eq.s32.totalorder %s19, 1
      %p32 = por %p30, %p31
      %p33 = scmp.ne.s32.totalorder %s24, %s25
      %p34 = scmp.eq.s32.totalorder %s19, 0
      %p35 = por %p33, %p34
      %p36 = scmp.ne.s32.totalorder %s24, %s25
      %p37 = scmp.eq.s32.totalorder %s20, 1
      %p38 = por %p36, %p37
      %p40 = scmp.ne.s32.totalorder %s25, %s39
      %p41 = scmp.eq.s32.totalorder %s20, 0
      %p42 = por %p40, %p41
      %s43 = ssub.s32 %s14, %s21
      %p44 = scmp.eq.s32.totalorder %s43, 0
      %s46 = sadd.s32 %s45, 1
      %s47 = scalar_select %p44, %s45, %s46
      %p50 = pneg %p44
      %p51 = scmp.eq.s32.totalorder %s14, 1
      %p52 = por %p50, %p51
      %p53 = scmp.ne.s32.totalorder %s45, %s48
      %p54 = scmp.eq.s32.totalorder %s14, 0
      %p55 = por %p53, %p54
      %p56 = scmp.ne.s32.totalorder %s45, %s48
      %p57 = scmp.eq.s32.totalorder %s19, 1
      %p58 = por %p56, %p57
      %p59 = scmp.ne.s32.totalorder %s48, %s49
      %p60 = scmp.eq.s32.totalorder %s19, 0
      %p61 = por %p59, %p60
      %p62 = scmp.ne.s32.totalorder %s48, %s49
      %p63 = scmp.eq.s32.totalorder %s20, 1
      %p64 = por %p62, %p63
      %p66 = scmp.ne.s32.totalorder %s49, %s65
      %p67 = scmp.eq.s32.totalorder %s20, 0
      %p68 = por %p66, %p67
      %s69 = ssub.s32 %s14, %s21
      %p70 = scmp.eq.s32.totalorder %s69, 0
      %s72 = sadd.s32 %s71, 1
      %s73 = scalar_select %p70, %s71, %s72
      %p76 = pneg %p70
      %p77 = scmp.eq.s32.totalorder %s14, 1
      %p78 = por %p76, %p77
      %p79 = scmp.ne.s32.totalorder %s71, %s74
      %p80 = scmp.eq.s32.totalorder %s14, 0
      %p81 = por %p79, %p80
      %p82 = scmp.ne.s32.totalorder %s71, %s74
      %p83 = scmp.eq.s32.totalorder %s19, 1
      %p84 = por %p82, %p83
      %p85 = scmp.ne.s32.totalorder %s74, %s75
      %p86 = scmp.eq.s32.totalorder %s19, 0
      %p87 = por %p85, %p86
      %p88 = scmp.ne.s32.totalorder %s74, %s75
      %p89 = scmp.eq.s32.totalorder %s20, 1
      %p90 = por %p88, %p89
      %p92 = scmp.ne.s32.totalorder %s75, %s91
      %p93 = scmp.eq.s32.totalorder %s20, 0
      %p94 = por %p92, %p93
      %p95 = scmp.le.s32.totalorder 1, %s14
      %p96 = scmp.lt.s32.totalorder %s14, 3
      %p97 = pnand %p95, %p96
      %p98 = pneg %p97
      // Predicated region
      $region9: #{arcface_subcenter_forward.1} parent=5 // pred_check
        _
      $region10: #{arcface_subcenter_forward.1} parent=5 // pred_check_branch
        %100 = sbr.rel (%p97) target = $region12
      $region11: #{arcface_subcenter_forward.1} parent=5 // pred_region
        %s101 = ssub.s32 %s14, 1
        // Predicated region
        $region13: #{arcface_subcenter_forward.1} parent=11 // pred_check
          %p102 = pneg %p35
        $region14: #{arcface_subcenter_forward.1} parent=11 // pred_check_branch
          %104 = sbr.rel (%p102) target = $region16
        $region15: #{arcface_subcenter_forward.1} parent=11 // pred_region
          _
        $region16: #{arcface_subcenter_forward.1} parent=11 // pred_fallthru
          _
      $region12: #{arcface_subcenter_forward.1} parent=5 // pred_fallthru
        _
      %p105 = scmp.lt.s32.totalorder %s14, 2
      // Predicated region
      $region17: #{arcface_subcenter_forward.1} parent=5 // pred_check
        %p106 = pneg %p105
      $region18: #{arcface_subcenter_forward.1} parent=5 // pred_check_branch
        %108 = sbr.rel (%p106) target = $region20
      $region19: #{arcface_subcenter_forward.1} parent=5 // pred_region
        // Predicated region
        $region21: #{arcface_subcenter_forward.1} parent=19 // pred_check
          %p109 = pneg %p55
        $region22: #{arcface_subcenter_forward.1} parent=19 // pred_check_branch
          %111 = sbr.rel (%p109) target = $region24
        $region23: #{arcface_subcenter_forward.1} parent=19 // pred_region
          %s112 = sand.u32 %s45, 1
          %s113 = scalar_lea.sflag [#allocation3], %s112
          %s114 = sand.u32 %s45, 1
          %s115 = smul.addr %s114, 192
          %s116 = scalar_lea.vmem [#allocation2], %s115
          %s118 = ssub.s32 3072, 3072
          %119 = vsyncadd %s113, %s118
          %s120 = smul.addr %s14, 128
          %s121 = scalar_lea.hbm %s1, %s120
          %s122 = sshll.u32 %s116, 4
          %s123 = int_to_ptr.vmem [resolvable:$true] %s122
          %128 = dma.hbm_to_vmem [thread:$0]  %s121, 3072, %s123, %s113, 256, 128, 8
        $region24: #{arcface_subcenter_forward.1} parent=19 // pred_fallthru
          _
      $region20: #{arcface_subcenter_forward.1} parent=5 // pred_fallthru
        _
      %p129 = scmp.le.s32.totalorder 1, %s14
      %p130 = scmp.lt.s32.totalorder %s14, 3
      %p131 = pnand %p129, %p130
      %p132 = pneg %p131
      // Predicated region
      $region25: #{arcface_subcenter_forward.1} parent=5 // pred_check
        _
      $region26: #{arcface_subcenter_forward.1} parent=5 // pred_check_branch
        %134 = sbr.rel (%p131) target = $region28
      $region27: #{arcface_subcenter_forward.1} parent=5 // pred_region
        %s135 = ssub.s32 %s14, 1
        %s136 = sand.u32 %s48, 1
        %s137 = scalar_lea.sflag [#allocation3], %s136
        %s138 = sand.u32 %s48, 1
        %s139 = smul.addr %s138, 192
        %s140 = scalar_lea.vmem [#allocation2], %s139
        // Predicated region
        $region29: #{arcface_subcenter_forward.1} parent=27 // pred_check
          %p141 = pneg %p61
        $region30: #{arcface_subcenter_forward.1} parent=27 // pred_check_branch
          %143 = sbr.rel (%p141) target = $region32
        $region31: #{arcface_subcenter_forward.1} parent=27 // pred_region
          %144 = dma.done %s137, 3072
        $region32: #{arcface_subcenter_forward.1} parent=27 // pred_fallthru
          _
        %p145 = pneg %p35
        %p146 = pneg %p32
        %s147 = sand.u32 %s48, 1
        %s148 = scalar_lea.sflag [#allocation3], %s147
        %s149 = sand.u32 %s48, 1
        %s150 = smul.addr %s149, 192
        %s151 = scalar_lea.vmem [#allocation2], %s150
        %p152 = pneg %p61
        %p153 = pneg %p58
        %p154 = pneg %p87
        %p155 = pneg %p84
        %s156 = sand.u32 %s74, 1
        %s157 = scalar_lea.sflag [#allocation4], %s156
        %s158 = sand.u32 %s74, 1
        %s159 = smul.addr %s158, 8
        %s160 = scalar_lea.vmem [#allocation5], %s159
        %v161 = vld [vmem:[%s0] sm:$0xff]
        %v162 = vld [vmem:[%s140] sm:$0xff]
        %v163 = vld [vmem:[%s140 + $0x8] sm:$0xff]
        %v164 = vld [vmem:[%s140 + $0x10] sm:$0xff]
        %v165 = vld [vmem:[%s140 + $0x18] sm:$0xff]
        %v166 = vld [vmem:[%s140 + $0x20] sm:$0xff]
        %v167 = vld [vmem:[%s140 + $0x28] sm:$0xff]
        %v168 = vld [vmem:[%s140 + $0x30] sm:$0xff]
        %v169 = vld [vmem:[%s140 + $0x38] sm:$0xff]
        %vm170 = vcmask 523264
        %v172 = vsel %vm170, %v161, 0
        %174 = vmatprep.subr.mxu0 0.0
        %175 = vmatpush1.msra.mxu0 %v162
        %176 = vmatprep.subr.mxu0 0.0
        %177 = vmatpush1.msra.mxu0 %v163
        %178 = vmatprep.subr.mxu0 0.0
        %179 = vmatpush1.msra.mxu0 %v164
        %180 = vmatprep.subr.mxu0 0.0
        %181 = vmatpush1.msra.mxu0 %v165
        %182 = vmatprep.subr.mxu0 0.0
        %183 = vmatpush1.msra.mxu0 %v166
        %184 = vmatprep.subr.mxu0 0.0
        %185 = vmatpush1.msra.mxu0 %v167
        %186 = vmatprep.subr.mxu0 0.0
        %187 = vmatpush1.msra.mxu0 %v168
        %188 = vmatprep.subr.mxu0 0.0
        %189 = vmatpush1.msra.mxu0 %v169
        %190 = vmatprep.subr.mxu0 0.0
        %191 = vmatpush1.msra.mxu0 0.0
        %192 = vmatprep.subr.mxu0 0.0
        %193 = vmatpush1.msra.mxu0 0.0
        %194 = vmatprep.subr.mxu0 0.0
        %195 = vmatpush1.msra.mxu0 0.0
        %196 = vmatprep.subr.mxu0 0.0
        %197 = vmatpush1.msra.mxu0 0.0
        %198 = vmatprep.subr.mxu0 0.0
        %199 = vmatpush1.msra.mxu0 0.0
        %200 = vmatprep.subr.mxu0 0.0
        %201 = vmatpush1.msra.mxu0 0.0
        %202 = vmatprep.subr.mxu0 0.0
        %203 = vmatpush1.msra.mxu0 0.0
        %204 = vmatprep.subr.mxu0 0.0
        %205 = vmatpush1.msra.mxu0 0.0
        %206 = vmatprep.subr.mxu0 0.0
        %207 = vmatpush1.msra.mxu0 0.0
        %208 = vmatprep.subr.mxu0 0.0
        %209 = vmatpush1.msra.mxu0 0.0
        %210 = vmatprep.subr.mxu0 0.0
        %211 = vmatpush1.msra.mxu0 0.0
        %212 = vmatprep.subr.mxu0 0.0
        %213 = vmatpush1.msra.mxu0 0.0
        %214 = vmatprep.subr.mxu0 0.0
        %215 = vmatpush1.msra.mxu0 0.0
        %216 = vmatprep.subr.mxu0 0.0
        %217 = vmatpush1.msra.mxu0 0.0
        %218 = vmatprep.subr.mxu0 0.0
        %219 = vmatpush1.msra.mxu0 0.0
        %220 = vmatprep.subr.mxu0 0.0
        %221 = vmatpush1.msra.mxu0 0.0
        %222 = vmatprep.subr.mxu0 0.0
        %223 = vmatpush1.msra.mxu0 0.0
        %224 = vmatprep.subr.mxu0 0.0
        %225 = vmatpush1.msra.mxu0 0.0
        %226 = vmatprep.subr.mxu0 0.0
        %227 = vmatpush1.msra.mxu0 0.0
        %228 = vmatprep.subr.mxu0 0.0
        %229 = vmatpush1.msra.mxu0 0.0
        %230 = vmatprep.subr.mxu0 0.0
        %231 = vmatpush1.msra.mxu0 0.0
        %232 = vmatprep.subr.mxu0 0.0
        %233 = vmatpush1.msra.mxu0 0.0
        %234 = vmatprep.subr.mxu0 0.0
        %235 = vmatpush1.msra.mxu0 0.0
        %236 = vmatprep.subr.mxu0 0.0
        %237 = vmatpush1.msra.mxu0 0.0
        %238 = vmatprep.mubr.f32.mxu0 0.0
        %239 = vmatmul.mubr.f32.gmra.mrb[0].mxu0 %v172
        %v240 = vpop.f32.mrb[0].mxu0
        %v241 = vadd.f32 0.0, %v240
        %v242 = vpop.f32.mrb[0].mxu0
        %243 = vdwg.mxu0
        %s244 = scalar_lea.vmem %s140, 64 [#allocation2]
        %v245 = vld [vmem:[%s244] sm:$0xff]
        %v246 = vld [vmem:[%s244 + $0x8] sm:$0xff]
        %v247 = vld [vmem:[%s244 + $0x10] sm:$0xff]
        %v248 = vld [vmem:[%s244 + $0x18] sm:$0xff]
        %v249 = vld [vmem:[%s244 + $0x20] sm:$0xff]
        %v250 = vld [vmem:[%s244 + $0x28] sm:$0xff]
        %v251 = vld [vmem:[%s244 + $0x30] sm:$0xff]
        %v252 = vld [vmem:[%s244 + $0x38] sm:$0xff]
        %253 = vmatprep.subr.mxu0 0.0
        %254 = vmatpush1.msra.mxu0 %v245
        %255 = vmatprep.subr.mxu0 0.0
        %256 = vmatpush1.msra.mxu0 %v246
        %257 = vmatprep.subr.mxu0 0.0
        %258 = vmatpush1.msra.mxu0 %v247
        %259 = vmatprep.subr.mxu0 0.0
        %260 = vmatpush1.msra.mxu0 %v248
        %261 = vmatprep.subr.mxu0 0.0
        %262 = vmatpush1.msra.mxu0 %v249
        %263 = vmatprep.subr.mxu0 0.0
        %264 = vmatpush1.msra.mxu0 %v250
        %265 = vmatprep.subr.mxu0 0.0
        %266 = vmatpush1.msra.mxu0 %v251
        %267 = vmatprep.subr.mxu0 0.0
        %268 = vmatpush1.msra.mxu0 %v252
        %269 = vmatprep.subr.mxu0 0.0
        %270 = vmatpush1.msra.mxu0 0.0
        %271 = vmatprep.subr.mxu0 0.0
        %272 = vmatpush1.msra.mxu0 0.0
        %273 = vmatprep.subr.mxu0 0.0
        %274 = vmatpush1.msra.mxu0 0.0
        %275 = vmatprep.subr.mxu0 0.0
        %276 = vmatpush1.msra.mxu0 0.0
        %277 = vmatprep.subr.mxu0 0.0
        %278 = vmatpush1.msra.mxu0 0.0
        %279 = vmatprep.subr.mxu0 0.0
        %280 = vmatpush1.msra.mxu0 0.0
        %281 = vmatprep.subr.mxu0 0.0
        %282 = vmatpush1.msra.mxu0 0.0
        %283 = vmatprep.subr.mxu0 0.0
        %284 = vmatpush1.msra.mxu0 0.0
        %285 = vmatprep.subr.mxu0 0.0
        %286 = vmatpush1.msra.mxu0 0.0
        %287 = vmatprep.subr.mxu0 0.0
        %288 = vmatpush1.msra.mxu0 0.0
        %289 = vmatprep.subr.mxu0 0.0
        %290 = vmatpush1.msra.mxu0 0.0
        %291 = vmatprep.subr.mxu0 0.0
        %292 = vmatpush1.msra.mxu0 0.0
        %293 = vmatprep.subr.mxu0 0.0
        %294 = vmatpush1.msra.mxu0 0.0
        %295 = vmatprep.subr.mxu0 0.0
        %296 = vmatpush1.msra.mxu0 0.0
        %297 = vmatprep.subr.mxu0 0.0
        %298 = vmatpush1.msra.mxu0 0.0
        %299 = vmatprep.subr.mxu0 0.0
        %300 = vmatpush1.msra.mxu0 0.0
        %301 = vmatprep.subr.mxu0 0.0
        %302 = vmatpush1.msra.mxu0 0.0
        %303 = vmatprep.subr.mxu0 0.0
        %304 = vmatpush1.msra.mxu0 0.0
        %305 = vmatprep.subr.mxu0 0.0
        %306 = vmatpush1.msra.mxu0 0.0
        %307 = vmatprep.subr.mxu0 0.0
        %308 = vmatpush1.msra.mxu0 0.0
        %309 = vmatprep.subr.mxu0 0.0
        %310 = vmatpush1.msra.mxu0 0.0
        %311 = vmatprep.subr.mxu0 0.0
        %312 = vmatpush1.msra.mxu0 0.0
        %313 = vmatprep.subr.mxu0 0.0
        %314 = vmatpush1.msra.mxu0 0.0
        %315 = vmatprep.subr.mxu0 0.0
        %316 = vmatpush1.msra.mxu0 0.0
        %317 = vmatprep.mubr.f32.mxu0 0.0
        %318 = vmatmul.mubr.f32.gmra.mrb[0].mxu0 %v172
        %v319 = vpop.f32.mrb[0].mxu0
        %v320 = vadd.f32 0.0, %v319
        %v321 = vpop.f32.mrb[0].mxu0
        %322 = vdwg.mxu0
        %v323 = vmax.f32 %v241, %v320
        %s324 = scalar_lea.vmem %s140, 128 [#allocation2]
        %v325 = vld [vmem:[%s324] sm:$0xff]
        %v326 = vld [vmem:[%s324 + $0x8] sm:$0xff]
        %v327 = vld [vmem:[%s324 + $0x10] sm:$0xff]
        %v328 = vld [vmem:[%s324 + $0x18] sm:$0xff]
        %v329 = vld [vmem:[%s324 + $0x20] sm:$0xff]
        %v330 = vld [vmem:[%s324 + $0x28] sm:$0xff]
        %v331 = vld [vmem:[%s324 + $0x30] sm:$0xff]
        %v332 = vld [vmem:[%s324 + $0x38] sm:$0xff]
        %333 = vmatprep.subr.mxu0 0.0
        %334 = vmatpush1.msra.mxu0 %v325
        %335 = vmatprep.subr.mxu0 0.0
        %336 = vmatpush1.msra.mxu0 %v326
        %337 = vmatprep.subr.mxu0 0.0
        %338 = vmatpush1.msra.mxu0 %v327
        %339 = vmatprep.subr.mxu0 0.0
        %340 = vmatpush1.msra.mxu0 %v328
        %341 = vmatprep.subr.mxu0 0.0
        %342 = vmatpush1.msra.mxu0 %v329
        %343 = vmatprep.subr.mxu0 0.0
        %344 = vmatpush1.msra.mxu0 %v330
        %345 = vmatprep.subr.mxu0 0.0
        %346 = vmatpush1.msra.mxu0 %v331
        %347 = vmatprep.subr.mxu0 0.0
        %348 = vmatpush1.msra.mxu0 %v332
        %349 = vmatprep.subr.mxu0 0.0
        %350 = vmatpush1.msra.mxu0 0.0
        %351 = vmatprep.subr.mxu0 0.0
        %352 = vmatpush1.msra.mxu0 0.0
        %353 = vmatprep.subr.mxu0 0.0
        %354 = vmatpush1.msra.mxu0 0.0
        %355 = vmatprep.subr.mxu0 0.0
        %356 = vmatpush1.msra.mxu0 0.0
        %357 = vmatprep.subr.mxu0 0.0
        %358 = vmatpush1.msra.mxu0 0.0
        %359 = vmatprep.subr.mxu0 0.0
        %360 = vmatpush1.msra.mxu0 0.0
        %361 = vmatprep.subr.mxu0 0.0
        %362 = vmatpush1.msra.mxu0 0.0
        %363 = vmatprep.subr.mxu0 0.0
        %364 = vmatpush1.msra.mxu0 0.0
        %365 = vmatprep.subr.mxu0 0.0
        %366 = vmatpush1.msra.mxu0 0.0
        %367 = vmatprep.subr.mxu0 0.0
        %368 = vmatpush1.msra.mxu0 0.0
        %369 = vmatprep.subr.mxu0 0.0
        %370 = vmatpush1.msra.mxu0 0.0
        %371 = vmatprep.subr.mxu0 0.0
        %372 = vmatpush1.msra.mxu0 0.0
        %373 = vmatprep.subr.mxu0 0.0
        %374 = vmatpush1.msra.mxu0 0.0
        %375 = vmatprep.subr.mxu0 0.0
        %376 = vmatpush1.msra.mxu0 0.0
        %377 = vmatprep.subr.mxu0 0.0
        %378 = vmatpush1.msra.mxu0 0.0
        %379 = vmatprep.subr.mxu0 0.0
        %380 = vmatpush1.msra.mxu0 0.0
        %381 = vmatprep.subr.mxu0 0.0
        %382 = vmatpush1.msra.mxu0 0.0
        %383 = vmatprep.subr.mxu0 0.0
        %384 = vmatpush1.msra.mxu0 0.0
        %385 = vmatprep.subr.mxu0 0.0
        %386 = vmatpush1.msra.mxu0 0.0
        %387 = vmatprep.subr.mxu0 0.0
        %388 = vmatpush1.msra.mxu0 0.0
        %389 = vmatprep.subr.mxu0 0.0
        %390 = vmatpush1.msra.mxu0 0.0
        %391 = vmatprep.subr.mxu0 0.0
        %392 = vmatpush1.msra.mxu0 0.0
        %393 = vmatprep.subr.mxu0 0.0
        %394 = vmatpush1.msra.mxu0 0.0
        %395 = vmatprep.subr.mxu0 0.0
        %396 = vmatpush1.msra.mxu0 0.0
        %397 = vmatprep.mubr.f32.mxu0 0.0
        %398 = vmatmul.mubr.f32.gmra.mrb[0].mxu0 %v172
        %v399 = vpop.f32.mrb[0].mxu0
        %v400 = vadd.f32 0.0, %v399
        %v401 = vpop.f32.mrb[0].mxu0
        %402 = vdwg.mxu0
        %v403 = vmax.f32 %v323, %v400
        %404 = vst [vmem:[%s160] sm:$0xff] %v403
        %s405 = sand.u32 %s74, 1
        %s406 = scalar_lea.sflag [#allocation4], %s405
        %s407 = sand.u32 %s74, 1
        %s408 = smul.addr %s407, 8
        %s409 = scalar_lea.vmem [#allocation5], %s408
        // Predicated region
        $region33: #{arcface_subcenter_forward.1} parent=27 // pred_check
          %p410 = pneg %p84
        $region34: #{arcface_subcenter_forward.1} parent=27 // pred_check_branch
          %412 = sbr.rel (%p410) target = $region36
        $region35: #{arcface_subcenter_forward.1} parent=27 // pred_region
          %s414 = ssub.s32 128, 128
          %415 = vsyncadd %s406, %s414
          %s416 = smul.addr %s19, 128
          %s417 = scalar_lea.hbm %s2, %s416
          %s419 = sshll.u32 %s409, 4
          %s420 = int_to_ptr.vmem [resolvable:$true] %s419
          %422 = dma.vmem_to_hbm [thread:$0]  %s420, 128, %s417, %s406
        $region36: #{arcface_subcenter_forward.1} parent=27 // pred_fallthru
          _
      $region28: #{arcface_subcenter_forward.1} parent=5 // pred_fallthru
        _
      %p423 = scmp.le.s32.totalorder 2, %s14
      // Predicated region
      $region37: #{arcface_subcenter_forward.1} parent=5 // pred_check
        %p424 = pneg %p423
      $region38: #{arcface_subcenter_forward.1} parent=5 // pred_check_branch
        %426 = sbr.rel (%p424) target = $region40
      $region39: #{arcface_subcenter_forward.1} parent=5 // pred_region
        %s427 = ssub.s32 %s14, 2
        // Predicated region
        $region41: #{arcface_subcenter_forward.1} parent=39 // pred_check
          %p428 = pneg %p90
        $region42: #{arcface_subcenter_forward.1} parent=39 // pred_check_branch
          %430 = sbr.rel (%p428) target = $region44
        $region43: #{arcface_subcenter_forward.1} parent=39 // pred_region
          %s431 = sand.u32 %s75, 1
          %s432 = scalar_lea.sflag [#allocation4], %s431
          %s433 = sand.u32 %s75, 1
          %s434 = smul.addr %s433, 8
          %s435 = scalar_lea.vmem [#allocation5], %s434
          %436 = dma.done %s432, 128
        $region44: #{arcface_subcenter_forward.1} parent=39 // pred_fallthru
          _
      $region40: #{arcface_subcenter_forward.1} parent=5 // pred_fallthru
        _
    $region6: #{arcface_subcenter_forward.1} parent=1 // loop_footer
      %s18 = sadd.s32 1, %s14
    $region7: #{arcface_subcenter_forward.1} parent=1 // loop_footer_branch
      %13 = sbr.rel target = $region3
    $region8: #{arcface_subcenter_forward.1} parent=1 // loop_exit
      _
    %437 = vsyncpa [#allocation3], 1
    %s438 = scalar_lea.sflag [#allocation3], 1
    %439 = vsyncpa %s438, 1
    %440 = vsyncpa [#allocation4], 1
    %s441 = scalar_lea.sflag [#allocation4], 1
    %442 = vsyncpa %s441, 1

</llo_original>
